<compile_context>
chip_gen: v5e
topology: v5e:2x2
jax: 0.10.0
libtpu: 0.0.40
codegen_flags: <defaults>
</compile_context>

<pallas_src>
import jax
import jax.numpy as jnp
from jax.experimental import pallas as pl
from jax.experimental.pallas import tpu as pltpu


def _cam_kernel(w_ref, feat_ref, out_ref):
    # w_ref:    (B, 1, NCt)  feature dtype -- fc row of the top-1 class (nc tile)
    # feat_ref: (B, NCt, HW) feature dtype -- flattened conv features (nc tile)
    # out_ref:  (B, 1, HW)   f32           -- accumulator, then CAM in [0, 255]
    k = pl.program_id(1)

    @pl.when(k == 0)
    def _():
        out_ref[...] = jnp.zeros_like(out_ref)

    # Partial cam for this nc tile; f32 MXU accumulation.
    out_ref[...] += jnp.einsum(
        "bxc,bcs->bxs", w_ref[...], feat_ref[...],
        preferred_element_type=jnp.float32)

    @pl.when(k == pl.num_programs(1) - 1)
    def _():
        # softmax + min/max normalization with the softmax denominator
        # cancelled:  minmax(softmax(cam)) == (e - min(e)) / (max(e) - min(e)),
        # and with e = exp(cam - max(cam)) the max of e over hw is exactly 1.
        cam = out_ref[...]                                 # (B, 1, HW) f32
        m = jnp.max(cam, axis=-1, keepdims=True)           # (B, 1, 1)
        e = jnp.exp(cam - m)
        emin = jnp.min(e, axis=-1, keepdims=True)          # (B, 1, 1)
        denom = 1.0 - emin
        # Exact division (one scalar per image); constant-CAM guard.
        scale = jnp.where(denom > 0.0, 255.0 / denom, 0.0)
        out_ref[...] = jnp.clip(jnp.floor((e - emin) * scale), 0.0, 255.0)


def _chip_info():
    """(vmem_capacity_bytes, tensorcores_per_chip) with conservative fallbacks."""
    try:
        info = pltpu.get_tpu_info()
        vmem_cap = int(getattr(info, "vmem_capacity_bytes", 64 << 20))
    except Exception:
        vmem_cap = 64 << 20            # v7x per-TC capacity: worst case
    try:
        kind = jax.devices()[0].device_kind.lower()
    except Exception:
        kind = ""
    num_tc = 2 if ("v7" in kind or "v4" in kind) else 1
    return vmem_cap, num_tc


def _choose_tiles(bz, nc, hw, feat_bytes, block_budget, min_batch_steps):
    """Pick (b_tile, nc_tile).

    b_tile: divisor of bz.  Single-TC chips grow it to bz when the block fits;
    2-TC chips prefer the largest tile that still yields >= min_batch_steps
    grid steps (>= 2 per core keeps the input DMA pipelined on each core).
    nc_tile: nc itself, or a divisor of nc that is a multiple of 128 (so the
    feature block's sublane dim stays legal), largest that fits the budget.
    """
    b_cands = [d for d in range(1, bz + 1) if bz % d == 0]
    nc_cands = sorted({d for d in range(128, nc, 128) if nc % d == 0} | {nc})

    def best_nc_for(bt):
        fitting = [c for c in nc_cands if bt * c * hw * feat_bytes <= block_budget]
        return max(fitting) if fitting else None

    fitting_b = [bt for bt in b_cands if best_nc_for(bt) is not None]
    if not fitting_b:
        # Even the smallest legal block exceeds the budget; take the minimal
        # configuration and let vmem_limit stretch toward physical capacity.
        return 1, min(nc_cands)
    stepped = [bt for bt in fitting_b if bz // bt >= min_batch_steps]
    pool = stepped if stepped else fitting_b
    bt = max(pool)
    return bt, best_nc_for(bt)


def attention_map_cam(logit, weight_softmax, feature_conv):
    """Compute the class-activation map exactly as attentionMap.forward does.

    Args:
      logit:          (bz, num_classes) float32        -- backbone classifier output
      weight_softmax: (num_classes, nc) float32        -- last fc weight (params[-2])
      feature_conv:   (bz, nc, h, w)    float32/bf16   -- last conv feature map
                      (streamed in its native dtype; no cast pass is added)

    Returns:
      (bz, h, w) uint8 CAM images (values 0..255).
    """
    bz, nc, h, w = feature_conv.shape
    hw = h * w
    feat_dtype = feature_conv.dtype
    feat_bytes = jnp.dtype(feat_dtype).itemsize

    # Top-1 class selection + fc-row gather stays in XLA (argmax(softmax)=argmax):
    # only nc weight values per image travel to VMEM.  Weights are cast to the
    # feature dtype (free: bz*nc elements) so the matvec operands match.
    idx = jnp.argmax(logit, axis=1)
    w_sel = weight_softmax[idx].astype(feat_dtype).reshape(bz, 1, nc)

    # Free reshape -- no cast, no pad, no extra HBM pass.
    feat = feature_conv.reshape(bz, nc, hw)

    vmem_cap, num_tc = _chip_info()
    block_budget = max(vmem_cap // 8, 2 << 20)       # per (double-buffered) input block
    min_batch_steps = 2 * num_tc if num_tc > 1 else 1
    b_tile, nc_tile = _choose_tiles(bz, nc, hw, feat_bytes, block_budget,
                                    min_batch_steps)
    grid = (bz // b_tile, nc // nc_tile)

    # Scoped-VMEM budget sized from the actual double-buffered blocks
    # (features + weights double-buffered, output resident/double-buffered
    # across batch blocks), clamped under the chip's physical VMEM.
    need = (2 * b_tile * nc_tile * (hw + 1) * feat_bytes
            + 2 * b_tile * hw * 4)
    vmem_limit = int(min(max(need + (4 << 20), 16 << 20), vmem_cap - (4 << 20)))

    out = pl.pallas_call(
        _cam_kernel,
        out_shape=jax.ShapeDtypeStruct((bz, 1, hw), jnp.float32),
        grid_spec=pltpu.PrefetchScalarGridSpec(
            num_scalar_prefetch=0,
            grid=grid,
            in_specs=[
                pl.BlockSpec((b_tile, 1, nc_tile), lambda i, k: (i, 0, k)),
                pl.BlockSpec((b_tile, nc_tile, hw), lambda i, k: (i, k, 0)),
            ],
            out_specs=pl.BlockSpec((b_tile, 1, hw), lambda i, k: (i, 0, 0)),
        ),
        compiler_params=pltpu.CompilerParams(
            dimension_semantics=("parallel", "arbitrary"),
            vmem_limit_bytes=vmem_limit),
    )(w_sel, feat)

    # glue: truncate to uint8, reshape like cam_img.reshape(h, w).  (The CAM is
    # bz*hw f32 -- negligible vs the feature stream, so emitting uint8 directly
    # from the kernel was skipped per review priority.)
    return out[:, 0, :].astype(jnp.uint8).reshape(bz, h, w)

    # TODO(synk): cv2.resize / cv2.applyColorMap / RGB->BGR heatmap blending of
    # the CAM with the input image has no Pallas equivalent and is omitted.


if __name__ == "__main__":
    # Small, deterministic shapes: batch=2, feature channels=32, 16x16 spatial,
    # 8 classes. The backbone forward is external; synthesize its outputs.
    bz, nc, h, w = 2, 32, 16, 16
    num_classes = 8

    key = jax.random.PRNGKey(0)
    k1, k2, k3 = jax.random.split(key, 3)
    logit = jax.random.normal(k1, (bz, num_classes), dtype=jnp.float32)
    weight_softmax = jax.random.normal(k2, (num_classes, nc), dtype=jnp.float32)
    feature_conv = jax.random.normal(k3, (bz, nc, h, w), dtype=jnp.float32)

    cam = attention_map_cam(logit, weight_softmax, feature_conv)
    cam = jax.block_until_ready(cam)

    # Pure-JAX f32 reference following the PyTorch module's math path
    # (softmax over the CAM, then min/max normalization, then uint8 truncation).
    idx = jnp.argmax(jax.nn.softmax(logit, axis=1), axis=1)
    cam_ref = jnp.einsum("bc,bcs->bs", weight_softmax[idx],
                         feature_conv.reshape(bz, nc, h * w),
                         precision=jax.lax.Precision.HIGHEST)
    cam_ref = jax.nn.softmax(cam_ref, axis=1)
    cam_ref = cam_ref - jnp.min(cam_ref, axis=1, keepdims=True)
    denom = jnp.max(cam_ref, axis=1, keepdims=True)
    cam_ref = jnp.where(denom > 0, cam_ref / denom, 0.0)
    cam_ref = jnp.clip(jnp.floor(255.0 * cam_ref), 0, 255).astype(jnp.uint8)
    cam_ref = cam_ref.reshape(bz, h, w)

    assert cam.shape == (bz, h, w) and cam.dtype == jnp.uint8
    max_err = int(jnp.max(jnp.abs(cam.astype(jnp.int32) - cam_ref.astype(jnp.int32))))
    # +-2 LSB: matmul-pass precision / order-of-operations differences between
    # the in-kernel MXU dot + cancelled-denominator epilogue and the XLA
    # softmax-then-normalize reference can flip floor() at integer boundaries.
    assert max_err <= 2, f"max CAM error {max_err} LSB"

    print("KERNEL_OK")
</pallas_src>

<mosaic_0001>
module attributes {stable_mosaic.version = 11 : i64} {
  func.func @_cam_kernel(%arg0: i32, %arg1: i32, %arg2: memref<2x1x32xf32, #tpu.memory_space<vmem>>, %arg3: memref<2x32x256xf32, #tpu.memory_space<vmem>>, %arg4: memref<2x1x256xf32, #tpu.memory_space<vmem>>) attributes {dimension_semantics = [#tpu.dimension_semantics<parallel>, #tpu.dimension_semantics<arbitrary>], iteration_bounds = array<i64: 1, 1>, scalar_prefetch = 0 : i64, scratch_operands = 0 : i64, tpu.core_type = #tpu.core_type<tc>, window_params = [{transform_indices = @transform_0, window_bounds = array<i64: 2, 1, 32>}, {transform_indices = @transform_1, window_bounds = array<i64: 2, 32, 256>}, {transform_indices = @transform_2, window_bounds = array<i64: 2, 1, 256>}]} {
    %c0_i32 = arith.constant 0 : i32
    %0 = arith.cmpi eq, %arg1, %c0_i32 : i32
    %1 = arith.extui %0 : i1 to i32
    %c0_i32_0 = arith.constant 0 : i32
    %2 = arith.cmpi ne, %1, %c0_i32_0 : i32
    scf.if %2 {
      %cst_14 = arith.constant 0.000000e+00 : f32
      %12 = vector.broadcast %cst_14 : f32 to vector<2x1x256xf32>
      %c0_15 = arith.constant 0 : index
      %c0_16 = arith.constant 0 : index
      %c0_17 = arith.constant 0 : index
      %13 = vector.load %arg4[%c0_15, %c0_16, %c0_17] : memref<2x1x256xf32, #tpu.memory_space<vmem>>, vector<2x1x256xf32>
      tpu.vector_store %arg4[%c0_15, %c0_16, %c0_17], %12 {strides = array<i32>} : memref<2x1x256xf32, #tpu.memory_space<vmem>>, vector<2x1x256xf32>,
    } else {
    }
    %c0 = arith.constant 0 : index
    %c0_1 = arith.constant 0 : index
    %c0_2 = arith.constant 0 : index
    %3 = vector.load %arg4[%c0, %c0_1, %c0_2] : memref<2x1x256xf32, #tpu.memory_space<vmem>>, vector<2x1x256xf32>
    %c0_3 = arith.constant 0 : index
    %c0_4 = arith.constant 0 : index
    %c0_5 = arith.constant 0 : index
    %4 = vector.load %arg2[%c0_3, %c0_4, %c0_5] : memref<2x1x32xf32, #tpu.memory_space<vmem>>, vector<2x1x32xf32>
    %c0_6 = arith.constant 0 : index
    %c0_7 = arith.constant 0 : index
    %c0_8 = arith.constant 0 : index
    %5 = vector.load %arg3[%c0_6, %c0_7, %c0_8] : memref<2x32x256xf32, #tpu.memory_space<vmem>>, vector<2x32x256xf32>
    "tpu.trace_start"() <{level = 10 : i32, message = "bxc,bcs->bxs"}> : () -> ()
    %cst = arith.constant dense<0.000000e+00> : vector<2x1x256xf32>
    %6 = tpu.matmul %4, %5, %cst {dimension_numbers = #tpu.dot_dimension_numbers<[2], [1], [1], [2], [0, 0, 0, 1, 1, 2], [0], [0]>} : vector<2x1x32xf32>, vector<2x32x256xf32>, vector<2x1x256xf32> -> vector<2x1x256xf32>
    "tpu.trace_stop"() : () -> ()
    %7 = arith.addf %3, %6 : vector<2x1x256xf32>
    %c0_9 = arith.constant 0 : index
    %c0_10 = arith.constant 0 : index
    %c0_11 = arith.constant 0 : index
    %8 = vector.load %arg4[%c0_9, %c0_10, %c0_11] : memref<2x1x256xf32, #tpu.memory_space<vmem>>, vector<2x1x256xf32>
    tpu.vector_store %arg4[%c0_9, %c0_10, %c0_11], %7 {strides = array<i32>} : memref<2x1x256xf32, #tpu.memory_space<vmem>>, vector<2x1x256xf32>,
    %c0_i32_12 = arith.constant 0 : i32
    %9 = arith.cmpi eq, %arg1, %c0_i32_12 : i32
    %10 = arith.extui %9 : i1 to i32
    %c0_i32_13 = arith.constant 0 : i32
    %11 = arith.cmpi ne, %10, %c0_i32_13 : i32
    scf.if %11 {
      %c0_14 = arith.constant 0 : index
      %c0_15 = arith.constant 0 : index
      %c0_16 = arith.constant 0 : index
      %12 = vector.load %arg4[%c0_14, %c0_15, %c0_16] : memref<2x1x256xf32, #tpu.memory_space<vmem>>, vector<2x1x256xf32>
      %cst_17 = arith.constant dense<0xFF800000> : vector<2x1xf32>
      %13 = vector.multi_reduction <maximumf>, %12, %cst_17 [2] : vector<2x1x256xf32> to vector<2x1xf32>
      %14 = vector.shape_cast %13 : vector<2x1xf32> to vector<2x1x1xf32>
      %15 = vector.broadcast %14 : vector<2x1x1xf32> to vector<2x1x256xf32>
      %16 = arith.subf %12, %15 : vector<2x1x256xf32>
      %17 = math.exp %16 : vector<2x1x256xf32>
      %cst_18 = arith.constant dense<0x7F800000> : vector<2x1xf32>
      %18 = vector.multi_reduction <minimumf>, %17, %cst_18 [2] : vector<2x1x256xf32> to vector<2x1xf32>
      %19 = vector.shape_cast %18 : vector<2x1xf32> to vector<2x1x1xf32>
      %cst_19 = arith.constant 1.000000e+00 : f32
      %20 = vector.broadcast %cst_19 : f32 to vector<2x1x1xf32>
      %21 = arith.subf %20, %19 : vector<2x1x1xf32>
      %cst_20 = arith.constant 0.000000e+00 : f32
      %22 = vector.broadcast %cst_20 : f32 to vector<2x1x1xf32>
      %23 = arith.cmpf ogt, %21, %22 : vector<2x1x1xf32>
      %cst_21 = arith.constant 2.550000e+02 : f32
      %24 = vector.broadcast %cst_21 : f32 to vector<2x1x1xf32>
      %25 = arith.divf %24, %21 : vector<2x1x1xf32>
      %cst_22 = arith.constant 0.000000e+00 : f32
      %26 = vector.broadcast %cst_22 : f32 to vector<2x1x1xf32>
      %27 = arith.select %23, %25, %26 : vector<2x1x1xi1>, vector<2x1x1xf32>
      %28 = vector.broadcast %19 : vector<2x1x1xf32> to vector<2x1x256xf32>
      %29 = arith.subf %17, %28 : vector<2x1x256xf32>
      %30 = vector.broadcast %27 : vector<2x1x1xf32> to vector<2x1x256xf32>
      %31 = arith.mulf %29, %30 : vector<2x1x256xf32>
      %32 = math.floor %31 : vector<2x1x256xf32>
      %cst_23 = arith.constant 0.000000e+00 : f32
      %cst_24 = arith.constant 2.550000e+02 : f32
      %33 = vector.broadcast %cst_23 : f32 to vector<2x1x256xf32>
      %34 = arith.maximumf %33, %32 : vector<2x1x256xf32>
      %35 = vector.broadcast %cst_24 : f32 to vector<2x1x256xf32>
      %36 = arith.minimumf %35, %34 : vector<2x1x256xf32>
      %c0_25 = arith.constant 0 : index
      %c0_26 = arith.constant 0 : index
      %c0_27 = arith.constant 0 : index
      %37 = vector.load %arg4[%c0_25, %c0_26, %c0_27] : memref<2x1x256xf32, #tpu.memory_space<vmem>>, vector<2x1x256xf32>
      tpu.vector_store %arg4[%c0_25, %c0_26, %c0_27], %36 {strides = array<i32>} : memref<2x1x256xf32, #tpu.memory_space<vmem>>, vector<2x1x256xf32>,
    } else {
    }
    return
  }
  func.func @transform_0(%arg0: i32, %arg1: i32) -> (i32, i32, i32) {
    %c0_i32 = arith.constant 0 : i32
    %c0_i32_0 = arith.constant 0 : i32
    return %arg0, %c0_i32, %arg1 : i32, i32, i32
  }
  func.func @transform_1(%arg0: i32, %arg1: i32) -> (i32, i32, i32) {
    %c0_i32 = arith.constant 0 : i32
    %c0_i32_0 = arith.constant 0 : i32
    return %arg0, %arg1, %c0_i32 : i32, i32, i32
  }
  func.func @transform_2(%arg0: i32, %arg1: i32) -> (i32, i32, i32) {
    %c0_i32 = arith.constant 0 : i32
    %c0_i32_0 = arith.constant 0 : i32
    %c0_i32_1 = arith.constant 0 : i32
    return %arg0, %c0_i32, %c0_i32_0 : i32, i32, i32
  }
}

</mosaic_0001>

<llo_original>
// kernel: tpu_custom_call.1
$region0: #{tpu_custom_call.1}
  #allocation0 [shape = 'u32[]', space=smem, size = 0x4, offset = 0x4, fixed_abs, tag = 'smem constant byte address 0x4 - core index']
  #allocation1 [shape = 'u32[72,128]{1,0:T(1,128)}', space=vmem, size = 0x9000, scoped, tag = 'internal scratch']
  %s0 = inlined_call_operand.hbm [shape: f32[2,1,32], index: 0, kind: input, shape index: {}]
  %s1 = inlined_call_operand.hbm [shape: f32[2,32,256], index: 1, kind: input, shape index: {}]
  %s2 = inlined_call_operand.hbm [shape: f32[2,1,256], index: 2, kind: output, shape index: {}]
  %s3 = sld [smem:[#allocation0]]
  $region34: #{tpu_custom_call.1} parent=0
    _
  %s5 = ssub.s32 1, %s3
  %s6 = scalar_select 0, %s5, %s3
  $region1: #{tpu_custom_call.1} parent=0
    #allocation2 [shape = 'u8[1024]{0}', space=vmem, size = 0x400, scoped, tag = 'input window, operand 0, single buffered']
    #allocation3 [shape = 's32[1]{0}', space=sflag, size = 0x4, scoped, tag = 'scoped memory for tpu_custom_call.1']
    #allocation4 [shape = 's32[1]{0}', space=sflag, size = 0x4, scoped, tag = 'scoped memory for tpu_custom_call.1']
    #allocation5 [shape = 'u8[65536]{0}', space=vmem, size = 0x10000, scoped, tag = 'input window, operand 1, single buffered']
    #allocation6 [shape = 's32[1]{0}', space=sflag, size = 0x4, scoped, tag = 'scoped memory for tpu_custom_call.1']
    #allocation7 [shape = 'u8[2048]{0}', space=vmem, size = 0x800, scoped, tag = 'output window, operand 0, single buffered']
    %7 = vsyncpa [#allocation3], 0
    %8 = vsyncpa [#allocation6], 0
    %9 = vsyncpa [#allocation4], 0
    // Predicated region
    $region2: #{tpu_custom_call.1} parent=1 // pred_check
      _
    $region3: #{tpu_custom_call.1} parent=1 // pred_check_branch
      %11 = sbr.rel (0) target = $region5
    $region4: #{tpu_custom_call.1} parent=1 // pred_region
      %13 = vsyncadd [#allocation3], 0
      %s14 = sshll.u32 %s0, 4
      %s15 = int_to_ptr.hbm [resolvable:$true] %s14
      %s16 = sshll.u32 [#allocation2], 4
      %s17 = int_to_ptr.vmem [resolvable:$true] %s16
      %22 = dma.hbm_to_vmem [thread:$0]  %s15, 32, %s17, [#allocation3], 16, 16, 1
    $region5: #{tpu_custom_call.1} parent=1 // pred_fallthru
      _
    // Predicated region
    $region6: #{tpu_custom_call.1} parent=1 // pred_check
      _
    $region7: #{tpu_custom_call.1} parent=1 // pred_check_branch
      %24 = sbr.rel (0) target = $region9
    $region8: #{tpu_custom_call.1} parent=1 // pred_region
      %26 = vsyncadd [#allocation6], 0
      %s27 = sshll.u32 %s1, 4
      %s28 = int_to_ptr.hbm [resolvable:$true] %s27
      %s29 = sshll.u32 [#allocation5], 4
      %s30 = int_to_ptr.vmem [resolvable:$true] %s29
      %35 = dma.hbm_to_vmem [thread:$0]  %s28, 2048, %s30, [#allocation6], 256, 256, 16
    $region9: #{tpu_custom_call.1} parent=1 // pred_fallthru
      _
    // Predicated region
    $region10: #{tpu_custom_call.1} parent=1 // pred_check
      _
    $region11: #{tpu_custom_call.1} parent=1 // pred_check_branch
      %37 = sbr.rel (0) target = $region13
    $region12: #{tpu_custom_call.1} parent=1 // pred_region
      %39 = dma.done [#allocation3], 32
    $region13: #{tpu_custom_call.1} parent=1 // pred_fallthru
      _
    // Predicated region
    $region14: #{tpu_custom_call.1} parent=1 // pred_check
      _
    $region15: #{tpu_custom_call.1} parent=1 // pred_check_branch
      %41 = sbr.rel (0) target = $region17
    $region16: #{tpu_custom_call.1} parent=1 // pred_region
      %43 = dma.done [#allocation6], 2048
    $region17: #{tpu_custom_call.1} parent=1 // pred_fallthru
      _
    %p44 = scmp.eq.s32.totalorder 0, 0
    // Predicated region
    $region18: #{tpu_custom_call.1} parent=1 // pred_check
      %p45 = pneg %p44
    $region19: #{tpu_custom_call.1} parent=1 // pred_check_branch
      %47 = sbr.rel (%p45) target = $region21
    $region20: #{tpu_custom_call.1} parent=1 // pred_region
      %v48 = vlaneseq
      %vm49 = vcmp.ge.s32.totalorder %v48, 0
      %vm50 = vcmp.lt.s32.totalorder %v48, 256
      %vm51 = vmand %vm49, %vm50
      %52 = vst.msk [vmem:[#allocation7] sm:$0x3] %vm51, 0.0
      %53 = vst.msk [vmem:[#allocation7 + $0x2] sm:$0x3] %vm51, 0.0
    $region21: #{tpu_custom_call.1} parent=1 // pred_fallthru
      _
    %v54 = vld [vmem:[#allocation7] sm:$0x3]
    %v55 = vld [vmem:[#allocation7 + $0x2] sm:$0x3]
    %v56 = vld [vmem:[#allocation2] sm:$0x1]
    %v57 = vld [vmem:[#allocation2 + $0x1] sm:$0x1]
    %v58 = vld [vmem:[#allocation5] sm:$0xff]
    %v59 = vld [vmem:[#allocation5 + $0x8] sm:$0xff]
    %v60 = vld [vmem:[#allocation5 + $0x10] sm:$0xff]
    %v61 = vld [vmem:[#allocation5 + $0x18] sm:$0xff]
    %v62 = vld [vmem:[#allocation5 + $0x20] sm:$0xff]
    %v63 = vld [vmem:[#allocation5 + $0x28] sm:$0xff]
    %v64 = vld [vmem:[#allocation5 + $0x30] sm:$0xff]
    %v65 = vld [vmem:[#allocation5 + $0x38] sm:$0xff]
    %v66 = vld [vmem:[#allocation5 + $0x40] sm:$0xff]
    %v67 = vld [vmem:[#allocation5 + $0x48] sm:$0xff]
    %v68 = vld [vmem:[#allocation5 + $0x50] sm:$0xff]
    %v69 = vld [vmem:[#allocation5 + $0x58] sm:$0xff]
    %v70 = vld [vmem:[#allocation5 + $0x60] sm:$0xff]
    %v71 = vld [vmem:[#allocation5 + $0x68] sm:$0xff]
    %v72 = vld [vmem:[#allocation5 + $0x70] sm:$0xff]
    %v73 = vld [vmem:[#allocation5 + $0x78] sm:$0xff]
    %vm74 = vcmask 261120
    %v76 = vsel %vm74, %v56, 0
    %78 = vmatpush.msra.mxu0 0.0
    %79 = vmatpush.msra.mxu0 0.0
    %80 = vmatpush.msra.mxu0 0.0
    %81 = vmatpush.msra.mxu0 0.0
    %82 = vmatpush.msra.mxu0 0.0
    %83 = vmatpush.msra.mxu0 0.0
    %84 = vmatpush.msra.mxu0 0.0
    %85 = vmatpush.msra.mxu0 0.0
    %86 = vmatpush.msra.mxu0 0.0
    %87 = vmatpush.msra.mxu0 0.0
    %88 = vmatpush.msra.mxu0 0.0
    %89 = vmatpush.msra.mxu0 0.0
    %90 = vmatpush.msra.mxu0 %v64
    %91 = vmatpush.msra.mxu0 %v62
    %92 = vmatpush.msra.mxu0 %v60
    %93 = vmatpush.msra.mxu0 %v58
    %94 = vmatmul.f32.gmra.mxu0 %v76
    %v95 = vpop.f32.mrf.mxu0
    %v96 = vadd.f32 0.0, %v95
    %97 = vdwg.mxu0
    %98 = vmatpush.msra.mxu0 0.0
    %99 = vmatpush.msra.mxu0 0.0
    %100 = vmatpush.msra.mxu0 0.0
    %101 = vmatpush.msra.mxu0 0.0
    %102 = vmatpush.msra.mxu0 0.0
    %103 = vmatpush.msra.mxu0 0.0
    %104 = vmatpush.msra.mxu0 0.0
    %105 = vmatpush.msra.mxu0 0.0
    %106 = vmatpush.msra.mxu0 0.0
    %107 = vmatpush.msra.mxu0 0.0
    %108 = vmatpush.msra.mxu0 0.0
    %109 = vmatpush.msra.mxu0 0.0
    %110 = vmatpush.msra.mxu0 %v65
    %111 = vmatpush.msra.mxu0 %v63
    %112 = vmatpush.msra.mxu0 %v61
    %113 = vmatpush.msra.mxu0 %v59
    %114 = vmatmul.f32.gmra.mxu0 %v76
    %v115 = vpop.f32.mrf.mxu0
    %v116 = vadd.f32 0.0, %v115
    %117 = vdwg.mxu0
    %v119 = vsel %vm74, %v57, 0
    %121 = vmatpush.msra.mxu0 0.0
    %122 = vmatpush.msra.mxu0 0.0
    %123 = vmatpush.msra.mxu0 0.0
    %124 = vmatpush.msra.mxu0 0.0
    %125 = vmatpush.msra.mxu0 0.0
    %126 = vmatpush.msra.mxu0 0.0
    %127 = vmatpush.msra.mxu0 0.0
    %128 = vmatpush.msra.mxu0 0.0
    %129 = vmatpush.msra.mxu0 0.0
    %130 = vmatpush.msra.mxu0 0.0
    %131 = vmatpush.msra.mxu0 0.0
    %132 = vmatpush.msra.mxu0 0.0
    %133 = vmatpush.msra.mxu0 %v72
    %134 = vmatpush.msra.mxu0 %v70
    %135 = vmatpush.msra.mxu0 %v68
    %136 = vmatpush.msra.mxu0 %v66
    %137 = vmatmul.f32.gmra.mxu0 %v119
    %v138 = vpop.f32.mrf.mxu0
    %v139 = vadd.f32 0.0, %v138
    %140 = vdwg.mxu0
    %141 = vmatpush.msra.mxu0 0.0
    %142 = vmatpush.msra.mxu0 0.0
    %143 = vmatpush.msra.mxu0 0.0
    %144 = vmatpush.msra.mxu0 0.0
    %145 = vmatpush.msra.mxu0 0.0
    %146 = vmatpush.msra.mxu0 0.0
    %147 = vmatpush.msra.mxu0 0.0
    %148 = vmatpush.msra.mxu0 0.0
    %149 = vmatpush.msra.mxu0 0.0
    %150 = vmatpush.msra.mxu0 0.0
    %151 = vmatpush.msra.mxu0 0.0
    %152 = vmatpush.msra.mxu0 0.0
    %153 = vmatpush.msra.mxu0 %v73
    %154 = vmatpush.msra.mxu0 %v71
    %155 = vmatpush.msra.mxu0 %v69
    %156 = vmatpush.msra.mxu0 %v67
    %157 = vmatmul.f32.gmra.mxu0 %v119
    %v158 = vpop.f32.mrf.mxu0
    %v159 = vadd.f32 0.0, %v158
    %160 = vdwg.mxu0
    %v165 = vrot.slane %v116, 7
    %v166 = vrot.slane %v159, 7
    %vm167 = vcmask 1040384
    %v168 = vsel %vm167, %v96, %v165
    %v169 = vsel %vm167, %v139, %v166
    %v172 = vadd.f32 %v54, %v168
    %v173 = vadd.f32 %v55, %v169
    %v174 = vlaneseq
    %vm175 = vcmp.ge.s32.totalorder %v174, 0
    %vm176 = vcmp.lt.s32.totalorder %v174, 256
    %vm177 = vmand %vm175, %vm176
    %178 = vst.msk [vmem:[#allocation7] sm:$0x3] %vm177, %v172
    %179 = vst.msk [vmem:[#allocation7 + $0x2] sm:$0x3] %vm177, %v173
    // Predicated region
    $region22: #{tpu_custom_call.1} parent=1 // pred_check
      %p180 = pneg %p44
    $region23: #{tpu_custom_call.1} parent=1 // pred_check_branch
      %182 = sbr.rel (%p180) target = $region25
    $region24: #{tpu_custom_call.1} parent=1 // pred_region
      %v183 = vld [vmem:[#allocation7] sm:$0x3]
      %v184 = vld [vmem:[#allocation7 + $0x2] sm:$0x3]
      %v187 = vperm.slane %v183, 0
      %v188 = vperm.slane %v183, 1
      %v189 = vperm.slane %v184, 0
      %v190 = vperm.slane %v184, 1
      %v195 = vsel %vm167, %v187, -inf
      %v196 = vsel %vm167, %v188, -inf
      %v197 = vmax.f32 %v195, %v196
      %198 = vmax.xlane.f32.xlu0 %v197
      %v199 = vpop.xlane.xlu0 %198
      %v200 = vsel %vm167, %v189, -inf
      %v201 = vsel %vm167, %v190, -inf
      %v202 = vmax.f32 %v200, %v201
      %203 = vmax.xlane.f32.xlu0 %v202
      %v204 = vpop.xlane.xlu0 %203
      %v207 = vperm.slane %v199, 0
      %v208 = vperm.slane %v204, 0
      %v211 = vsub.f32 %v183, %v207
      %v212 = vsub.f32 %v184, %v208
      %v213 = vmul.f32 %v211, 1.442695
      %v214 = vpow.pop %v213
      %v215 = vmul.f32 %v212, 1.442695
      %v216 = vpow.pop %v215
      %v219 = vperm.slane %v214, 0
      %v220 = vperm.slane %v214, 1
      %v221 = vperm.slane %v216, 0
      %v222 = vperm.slane %v216, 1
      %v227 = vsel %vm167, %v219, inf
      %v228 = vsel %vm167, %v220, inf
      %v229 = vmin.f32 %v227, %v228
      %230 = vmin.xlane.f32.xlu0 %v229
      %v231 = vpop.xlane.xlu0 %230
      %v232 = vsel %vm167, %v221, inf
      %v233 = vsel %vm167, %v222, inf
      %v234 = vmin.f32 %v232, %v233
      %235 = vmin.xlane.f32.xlu0 %v234
      %v236 = vpop.xlane.xlu0 %235
      %v237 = vsub.f32 1.0, %v231
      %v238 = vsub.f32 1.0, %v236
      %vm239 = vcmp.gt.f32.partialorder %v237, 0.0
      %vm240 = vcmp.gt.f32.partialorder %v238, 0.0
      %v241 = vrcp.pop %v237
      %v242 = vmul.f32 %v237, %v241
      %v243 = vsub.f32 1.0, %v242
      %v244 = vmul.f32 %v241, %v243
      %v245 = vadd.f32 %v241, %v244
      %vm246 = vweird.f32 %v237
      %vm247 = vweird.f32 %v241
      %vm248 = vmor %vm246, %vm247
      %v249 = vsel %vm248, %v241, %v245
      %v250 = vand.u32 2147483647, %v237
      %vm251 = vcmp.eq.f32.partialorder %v250, 8.507059e+37
      %v252 = vand.u32 %v237, 2147483648
      %v253 = vor.u32 1.1754944e-38, %v252
      %v254 = vsel %vm251, %v253, %v249
      %v255 = vmul.f32 255.0, %v254
      %v256 = vrcp.pop %v238
      %v257 = vmul.f32 %v238, %v256
      %v258 = vsub.f32 1.0, %v257
      %v259 = vmul.f32 %v256, %v258
      %v260 = vadd.f32 %v256, %v259
      %vm261 = vweird.f32 %v238
      %vm262 = vweird.f32 %v256
      %vm263 = vmor %vm261, %vm262
      %v264 = vsel %vm263, %v256, %v260
      %v265 = vand.u32 2147483647, %v238
      %vm266 = vcmp.eq.f32.partialorder %v265, 8.507059e+37
      %v267 = vand.u32 %v238, 2147483648
      %v268 = vor.u32 1.1754944e-38, %v267
      %v269 = vsel %vm266, %v268, %v264
      %v270 = vmul.f32 255.0, %v269
      %v271 = vsel %vm239, %v255, 0.0
      %v272 = vsel %vm240, %v270, 0.0
      %v275 = vperm.slane %v231, 0
      %v276 = vperm.slane %v236, 0
      %v279 = vsub.f32 %v214, %v275
      %v280 = vsub.f32 %v216, %v276
      %v283 = vperm.slane %v271, 0
      %v284 = vperm.slane %v272, 0
      %v287 = vmul.f32 %v279, %v283
      %v288 = vmul.f32 %v280, %v284
      %v289 = vfloor.f32 %v287
      %v290 = vfloor.f32 %v288
      %v291 = vmax.f32 %v289, 0.0
      %v292 = vmax.f32 %v290, 0.0
      %v293 = vmin.f32 %v291, 255.0
      %v294 = vmin.f32 %v292, 255.0
      %295 = vst.msk [vmem:[#allocation7] sm:$0x3] %vm177, %v293
      %296 = vst.msk [vmem:[#allocation7 + $0x2] sm:$0x3] %vm177, %v294
    $region25: #{tpu_custom_call.1} parent=1 // pred_fallthru
      _
    // Predicated region
    $region26: #{tpu_custom_call.1} parent=1 // pred_check
      _
    $region27: #{tpu_custom_call.1} parent=1 // pred_check_branch
      %298 = sbr.rel (0) target = $region29
    $region28: #{tpu_custom_call.1} parent=1 // pred_region
      %300 = vsyncadd [#allocation4], 0
      %s301 = sshll.u32 [#allocation7], 4
      %s302 = int_to_ptr.vmem [resolvable:$true] %s301
      %s303 = sshll.u32 %s2, 4
      %s304 = int_to_ptr.hbm [resolvable:$true] %s303
      %309 = dma.vmem_to_hbm [thread:$0]  %s302, 64, %s304, [#allocation4], 32, 32, 2
    $region29: #{tpu_custom_call.1} parent=1 // pred_fallthru
      _
    // Predicated region
    $region30: #{tpu_custom_call.1} parent=1 // pred_check
      _
    $region31: #{tpu_custom_call.1} parent=1 // pred_check_branch
      %311 = sbr.rel (0) target = $region33
    $region32: #{tpu_custom_call.1} parent=1 // pred_region
      %313 = dma.done [#allocation4], 64
    $region33: #{tpu_custom_call.1} parent=1 // pred_fallthru
      _
    %314 = vsyncpa [#allocation3], 1
    %315 = vsyncpa [#allocation6], 1
    %316 = vsyncpa [#allocation4], 1

</llo_original>
